<compile_context>
chip_gen: v6e
topology: v6e:2x2x1
jax: 0.10.0
libtpu: 0.0.40
codegen_flags: <defaults>
</compile_context>

<pallas_src>
import functools
import math

import numpy as np
import jax
import jax.numpy as jnp
from jax.experimental import pallas as pl
from jax.experimental.pallas import tpu as pltpu


def _round_up(x, m):
    return ((x + m - 1) // m) * m


@functools.partial(jax.jit, static_argnames=("stride", "padding", "eps"))
def conv3d_block_forward(x, weight, bias, gamma, beta, *,
                         stride=1, padding=0, eps=1e-5):
    """x: (N, Cin, D, H, W) float32.  Returns (N, Cout, Do, Ho, Wo) float32."""
    del bias  # exact: conv bias cancels under training-mode BatchNorm (mean subtracted).

    N, Cin, D, H, W = x.shape
    Cout, _, KD, KH, KW = weight.shape
    s, p = stride, padding
    Do = (D + 2 * p - KD) // s + 1
    Ho = (H + 2 * p - KH) // s + 1
    Wo = (W + 2 * p - KW) // s + 1
    Dp, Hp, Wp = D + 2 * p, H + 2 * p, W + 2 * p

    # Lane-dense channel padding: smallest Cout_p so Wo*Cout_p is a multiple of 128.
    q = 128 // math.gcd(Wo, 128)
    Cout_p = _round_up(max(Cout, 1), q)
    lanes = Wo * Cout_p          # minor (lane) dim of all conv outputs
    WC = Wp * Cin
    KWC = KH * WC                # contraction dim, ordered (kh, w, ci)
    MR = Do * Ho                 # matmul M rows per sample

    # ---- layout glue: NCDHW -> channels-last, zero-pad spatially, then fold the KH
    #      H-taps into the contraction dim (KH-fold duplication of the small padded
    #      input only; the KW taps + W-stride are folded into the expanded weight).
    #      TODO(synk): for production shapes, fold this pad/relayout into the kernel
    #      (zero-fill boundary rows under pl.when) to avoid the extra HBM round trip.
    xl = jnp.transpose(x, (0, 2, 3, 4, 1)).astype(jnp.float32)    # (N, D, H, W, Cin)
    xp = jnp.pad(xl, ((0, 0), (p, p), (p, p), (p, p), (0, 0)))    # (N, Dp, Hp, Wp, Cin)
    taps = [xp[:, :, kh:kh + (Ho - 1) * s + 1:s, :, :] for kh in range(KH)]
    xh = jnp.stack(taps, axis=3)                                  # (N, Dp, Ho, KH, Wp, Cin)
    xh = xh.reshape(N, Dp * Ho, KWC)                              # row = d*Ho + ho

    # ---- expanded weight: folds kw taps, W-stride, Cout padding and the kh taps into a
    #      (KWC, lanes) matrix per kd.  Kept resident in VMEM (constant index_map).
    #      wexp[kd, kh*WC + w*Cin + ci, wo*Cout_p + co] = weight[co,ci,kd,kh,kw] iff
    #      w == wo*s + kw and co < Cout.
    #      TODO(synk): for large W*Cin*Cout, gate the full-resident path on
    #      pltpu.get_tpu_info().vmem_capacity_bytes (v7x has 64 MiB) and K-tile instead.
    sel = np.zeros((KW, Wp, Wo), np.float32)
    for kw in range(KW):
        for wo in range(Wo):
            sel[kw, wo * s + kw, wo] = 1.0
    w_perm = jnp.transpose(weight, (2, 3, 4, 1, 0)).astype(jnp.float32)  # (KD,KH,KW,Cin,Cout)
    wexp = jnp.einsum("xwv,dhxio->dhwivo", jnp.asarray(sel), w_perm)     # (KD,KH,Wp,Cin,Wo,Cout)
    wexp = jnp.pad(wexp, ((0, 0),) * 5 + ((0, Cout_p - Cout),))
    wexp = wexp.reshape(KD, KWC, lanes)

    # ---------------- kernel 1: implicit-GEMM conv + per-sample partial stats ----------
    def conv_kernel(x_ref, w_ref, y_ref, psum_ref, psq_ref):
        if s == 1:
            acc = None
            for kd in range(KD):                       # static unroll; 8-aligned slices
                lhs = x_ref[0, kd * Ho:kd * Ho + MR, :]             # (MR, KWC)
                t = jnp.dot(lhs, w_ref[kd], preferred_element_type=jnp.float32)
                acc = t if acc is None else acc + t
        else:
            blocks = []
            for do in range(Do):
                a = None
                for kd in range(KD):
                    r0 = (do * s + kd) * Ho
                    t = jnp.dot(x_ref[0, r0:r0 + Ho, :], w_ref[kd],
                                preferred_element_type=jnp.float32)
                    a = t if a is None else a + t
                blocks.append(a)
            acc = jnp.concatenate(blocks, axis=0)
        y_ref[0] = acc.astype(y_ref.dtype)                           # (MR, lanes)
        psum_ref[0] = jnp.sum(acc, axis=0, keepdims=True)            # (1, lanes)
        psq_ref[0] = jnp.sum(acc * acc, axis=0, keepdims=True)       # (1, lanes)

    conv_y, psum, psq = pl.pallas_call(
        conv_kernel,
        out_shape=(
            jax.ShapeDtypeStruct((N, MR, lanes), jnp.float32),
            jax.ShapeDtypeStruct((N, 1, lanes), jnp.float32),
            jax.ShapeDtypeStruct((N, 1, lanes), jnp.float32),
        ),
        grid_spec=pltpu.PrefetchScalarGridSpec(
            num_scalar_prefetch=0,
            grid=(N,),
            in_specs=[
                # full per-sample input slab
                pl.BlockSpec((1, Dp * Ho, KWC), lambda n: (n, 0, 0)),
                # full expanded weight, constant index_map -> fetched once, VMEM-resident
                pl.BlockSpec((KD, KWC, lanes), lambda n: (0, 0, 0)),
            ],
            out_specs=(
                pl.BlockSpec((1, MR, lanes), lambda n: (n, 0, 0)),
                pl.BlockSpec((1, 1, lanes), lambda n: (n, 0, 0)),
                pl.BlockSpec((1, 1, lanes), lambda n: (n, 0, 0)),
            ),
        ),
        compiler_params=pltpu.CompilerParams(
            dimension_semantics=("parallel",)),     # N=2 -> both v7x TCs get one sample
    )(xh, wexp)

    # ---- BatchNorm3d training-mode stats from the per-sample partial sums (JAX reduce)
    # TODO(synk): E[x^2]-E[x]^2 in f32 cancels badly when |mean| >> std; switch to a
    # centered / two-pass variance for non-zero-mean production activations.
    Mtot = N * Do * Ho * Wo
    ch_sum = psum.reshape(N, Wo, Cout_p).sum(axis=(0, 1))[:Cout]
    ch_sq = psq.reshape(N, Wo, Cout_p).sum(axis=(0, 1))[:Cout]
    mean = ch_sum / Mtot
    var = ch_sq / Mtot - mean * mean                 # biased variance (BN training mode)
    inv_std = jax.lax.rsqrt(var + eps)

    scale = gamma.astype(jnp.float32) * inv_std
    shift = beta.astype(jnp.float32) - mean * scale
    scale_t = jnp.tile(jnp.pad(scale, (0, Cout_p - Cout)), Wo).reshape(1, lanes)
    shift_t = jnp.tile(jnp.pad(shift, (0, Cout_p - Cout)), Wo).reshape(1, lanes)

    # ---------------- kernel 2: fused scale * y + shift, ReLU (mem-bound) --------------
    def bn_relu_kernel(y_ref, sc_ref, sh_ref, o_ref):
        o_ref[...] = jnp.maximum(y_ref[...] * sc_ref[...] + sh_ref[...],
                                 0.0).astype(o_ref.dtype)

    R = N * MR
    y2 = conv_y.reshape(R, lanes)
    # Row tile: a divisor of R (no jnp.pad copy of the activations), multiple of 8,
    # capped at ~3 MiB so double-buffered in+out blocks fit v5e's 16 MiB scoped VMEM.
    row_cap = max(8, (((3 << 20) // (lanes * 4)) // 8) * 8)
    tr = R
    if R > row_cap or R % 8 != 0:
        tr = None
        for cand in range(min(R, row_cap), 0, -1):
            if R % cand == 0 and cand % 8 == 0:
                tr = cand
                break
        if tr is None:
            tr = R          # rare ragged shapes: single full block (still correct)

    out2 = pl.pallas_call(
        bn_relu_kernel,
        out_shape=jax.ShapeDtypeStruct((R, lanes), jnp.float32),
        grid_spec=pltpu.PrefetchScalarGridSpec(
            num_scalar_prefetch=0,
            grid=(R // tr,),
            in_specs=[
                pl.BlockSpec((tr, lanes), lambda i: (i, 0)),
                pl.BlockSpec((1, lanes), lambda i: (0, 0)),
                pl.BlockSpec((1, lanes), lambda i: (0, 0)),
            ],
            out_specs=pl.BlockSpec((tr, lanes), lambda i: (i, 0)),
        ),
        compiler_params=pltpu.CompilerParams(dimension_semantics=("parallel",)),
    )(y2, scale_t, shift_t)

    out = out2.reshape(N, Do, Ho, Wo, Cout_p)[..., :Cout]
    return jnp.transpose(out, (0, 4, 1, 2, 3))               # back to NCDHW


def _reference(x, weight, bias, gamma, beta, *, stride, padding, eps=1e-5):
    """Pure-JAX reference: Conv3d + BN3d (batch stats) + ReLU, NCDHW."""
    y = jax.lax.conv_general_dilated(
        x, weight,
        window_strides=(stride,) * 3,
        padding=[(padding, padding)] * 3,
        dimension_numbers=("NCDHW", "OIDHW", "NCDHW"),
    ) + bias.reshape(1, -1, 1, 1, 1)
    mean = jnp.mean(y, axis=(0, 2, 3, 4), keepdims=True)
    var = jnp.mean((y - mean) ** 2, axis=(0, 2, 3, 4), keepdims=True)
    yhat = (y - mean) * jax.lax.rsqrt(var + eps)
    return jnp.maximum(yhat * gamma.reshape(1, -1, 1, 1, 1)
                       + beta.reshape(1, -1, 1, 1, 1), 0.0)


if __name__ == "__main__":
    # module hyperparameters (small, consistent with Conv3DBlock.__init__)
    in_channels, out_channels, kernel_size, stride, padding = 4, 8, 3, 1, 1
    N, D, H, W = 2, 8, 8, 8

    key = jax.random.PRNGKey(0)
    k_x, k_w, k_b, k_g, k_be = jax.random.split(key, 5)

    x = jax.random.normal(k_x, (N, in_channels, D, H, W), jnp.float32)
    weight = 0.1 * jax.random.normal(
        k_w, (out_channels, in_channels, kernel_size, kernel_size, kernel_size),
        jnp.float32)
    bias = 0.1 * jax.random.normal(k_b, (out_channels,), jnp.float32)
    gamma = 1.0 + 0.1 * jax.random.normal(k_g, (out_channels,), jnp.float32)
    beta = 0.1 * jax.random.normal(k_be, (out_channels,), jnp.float32)

    out = conv3d_block_forward(x, weight, bias, gamma, beta,
                               stride=stride, padding=padding)
    out = jax.block_until_ready(out)

    ref = _reference(x, weight, bias, gamma, beta, stride=stride, padding=padding)
    assert out.shape == ref.shape, (out.shape, ref.shape)
    err = float(jnp.max(jnp.abs(out - ref)))
    assert err < 1e-3, err

    print("KERNEL_OK")
</pallas_src>

<mosaic_0001>
module attributes {stable_mosaic.version = 11 : i64} {
  func.func @conv_kernel(%arg0: i32, %arg1: memref<1x80x120xf32, #tpu.memory_space<vmem>>, %arg2: memref<3x120x128xf32, #tpu.memory_space<vmem>>, %arg3: memref<1x64x128xf32, #tpu.memory_space<vmem>>, %arg4: memref<1x1x128xf32, #tpu.memory_space<vmem>>, %arg5: memref<1x1x128xf32, #tpu.memory_space<vmem>>) attributes {dimension_semantics = [#tpu.dimension_semantics<parallel>], iteration_bounds = array<i64: 2>, scalar_prefetch = 0 : i64, scratch_operands = 0 : i64, tpu.core_type = #tpu.core_type<tc>, window_params = [{transform_indices = @transform_0, window_bounds = array<i64: 1, 80, 120>}, {pipeline_mode = #tpu.pipeline_mode<synchronous>, transform_indices = @transform_1, window_bounds = array<i64: 3, 120, 128>}, {transform_indices = @transform_2, window_bounds = array<i64: 1, 64, 128>}, {transform_indices = @transform_3, window_bounds = array<i64: 1, 1, 128>}, {transform_indices = @transform_4, window_bounds = array<i64: 1, 1, 128>}]} {
    %c0 = arith.constant 0 : index
    %c0_0 = arith.constant 0 : index
    %c0_1 = arith.constant 0 : index
    %0 = vector.load %arg1[%c0, %c0_0, %c0_1] : memref<1x80x120xf32, #tpu.memory_space<vmem>>, vector<1x64x120xf32>
    %1 = vector.shape_cast %0 : vector<1x64x120xf32> to vector<64x120xf32>
    %c0_2 = arith.constant 0 : index
    %c0_3 = arith.constant 0 : index
    %c0_4 = arith.constant 0 : index
    %2 = vector.load %arg2[%c0_2, %c0_3, %c0_4] : memref<3x120x128xf32, #tpu.memory_space<vmem>>, vector<1x120x128xf32>
    %3 = vector.shape_cast %2 : vector<1x120x128xf32> to vector<120x128xf32>
    %cst = arith.constant dense<0.000000e+00> : vector<64x128xf32>
    %4 = tpu.matmul %1, %3, %cst {dimension_numbers = #tpu.dot_dimension_numbers<[1], [0], [0], [1], [0, 0, 1, 1], [], []>} : vector<64x120xf32>, vector<120x128xf32>, vector<64x128xf32> -> vector<64x128xf32>
    %c0_5 = arith.constant 0 : index
    %c8 = arith.constant 8 : index
    %c0_6 = arith.constant 0 : index
    %5 = vector.load %arg1[%c0_5, %c8, %c0_6] : memref<1x80x120xf32, #tpu.memory_space<vmem>>, vector<1x64x120xf32>
    %6 = vector.shape_cast %5 : vector<1x64x120xf32> to vector<64x120xf32>
    %c1 = arith.constant 1 : index
    %c0_7 = arith.constant 0 : index
    %c0_8 = arith.constant 0 : index
    %7 = vector.load %arg2[%c1, %c0_7, %c0_8] : memref<3x120x128xf32, #tpu.memory_space<vmem>>, vector<1x120x128xf32>
    %8 = vector.shape_cast %7 : vector<1x120x128xf32> to vector<120x128xf32>
    %cst_9 = arith.constant dense<0.000000e+00> : vector<64x128xf32>
    %9 = tpu.matmul %6, %8, %cst_9 {dimension_numbers = #tpu.dot_dimension_numbers<[1], [0], [0], [1], [0, 0, 1, 1], [], []>} : vector<64x120xf32>, vector<120x128xf32>, vector<64x128xf32> -> vector<64x128xf32>
    %10 = arith.addf %4, %9 : vector<64x128xf32>
    %c0_10 = arith.constant 0 : index
    %c16 = arith.constant 16 : index
    %c0_11 = arith.constant 0 : index
    %11 = vector.load %arg1[%c0_10, %c16, %c0_11] : memref<1x80x120xf32, #tpu.memory_space<vmem>>, vector<1x64x120xf32>
    %12 = vector.shape_cast %11 : vector<1x64x120xf32> to vector<64x120xf32>
    %c2 = arith.constant 2 : index
    %c0_12 = arith.constant 0 : index
    %c0_13 = arith.constant 0 : index
    %13 = vector.load %arg2[%c2, %c0_12, %c0_13] : memref<3x120x128xf32, #tpu.memory_space<vmem>>, vector<1x120x128xf32>
    %14 = vector.shape_cast %13 : vector<1x120x128xf32> to vector<120x128xf32>
    %cst_14 = arith.constant dense<0.000000e+00> : vector<64x128xf32>
    %15 = tpu.matmul %12, %14, %cst_14 {dimension_numbers = #tpu.dot_dimension_numbers<[1], [0], [0], [1], [0, 0, 1, 1], [], []>} : vector<64x120xf32>, vector<120x128xf32>, vector<64x128xf32> -> vector<64x128xf32>
    %16 = arith.addf %10, %15 : vector<64x128xf32>
    %c0_15 = arith.constant 0 : index
    %c0_16 = arith.constant 0 : index
    %c0_17 = arith.constant 0 : index
    %17 = vector.load %arg3[%c0_15, %c0_16, %c0_17] : memref<1x64x128xf32, #tpu.memory_space<vmem>>, vector<1x64x128xf32>
    %18 = vector.shape_cast %17 : vector<1x64x128xf32> to vector<64x128xf32>
    %19 = vector.shape_cast %16 : vector<64x128xf32> to vector<1x64x128xf32>
    tpu.vector_store %arg3[%c0_15, %c0_16, %c0_17], %19 {strides = array<i32>} : memref<1x64x128xf32, #tpu.memory_space<vmem>>, vector<1x64x128xf32>,
    %cst_18 = arith.constant dense<0.000000e+00> : vector<128xf32>
    %20 = vector.multi_reduction <add>, %16, %cst_18 [0] : vector<64x128xf32> to vector<128xf32>
    %21 = vector.shape_cast %20 : vector<128xf32> to vector<1x128xf32>
    %c0_19 = arith.constant 0 : index
    %c0_20 = arith.constant 0 : index
    %c0_21 = arith.constant 0 : index
    %22 = vector.load %arg4[%c0_19, %c0_20, %c0_21] : memref<1x1x128xf32, #tpu.memory_space<vmem>>, vector<1x1x128xf32>
    %23 = vector.shape_cast %22 : vector<1x1x128xf32> to vector<1x128xf32>
    %24 = vector.shape_cast %21 : vector<1x128xf32> to vector<1x1x128xf32>
    tpu.vector_store %arg4[%c0_19, %c0_20, %c0_21], %24 {strides = array<i32>} : memref<1x1x128xf32, #tpu.memory_space<vmem>>, vector<1x1x128xf32>,
    %25 = arith.mulf %16, %16 : vector<64x128xf32>
    %cst_22 = arith.constant dense<0.000000e+00> : vector<128xf32>
    %26 = vector.multi_reduction <add>, %25, %cst_22 [0] : vector<64x128xf32> to vector<128xf32>
    %27 = vector.shape_cast %26 : vector<128xf32> to vector<1x128xf32>
    %c0_23 = arith.constant 0 : index
    %c0_24 = arith.constant 0 : index
    %c0_25 = arith.constant 0 : index
    %28 = vector.load %arg5[%c0_23, %c0_24, %c0_25] : memref<1x1x128xf32, #tpu.memory_space<vmem>>, vector<1x1x128xf32>
    %29 = vector.shape_cast %28 : vector<1x1x128xf32> to vector<1x128xf32>
    %30 = vector.shape_cast %27 : vector<1x128xf32> to vector<1x1x128xf32>
    tpu.vector_store %arg5[%c0_23, %c0_24, %c0_25], %30 {strides = array<i32>} : memref<1x1x128xf32, #tpu.memory_space<vmem>>, vector<1x1x128xf32>,
    return
  }
  func.func @transform_0(%arg0: i32) -> (i32, i32, i32) {
    %c0_i32 = arith.constant 0 : i32
    %c0_i32_0 = arith.constant 0 : i32
    %c0_i32_1 = arith.constant 0 : i32
    return %arg0, %c0_i32, %c0_i32_0 : i32, i32, i32
  }
  func.func @transform_1(%arg0: i32) -> (i32, i32, i32) {
    %c0_i32 = arith.constant 0 : i32
    %c0_i32_0 = arith.constant 0 : i32
    %c0_i32_1 = arith.constant 0 : i32
    %c0_i32_2 = arith.constant 0 : i32
    return %c0_i32, %c0_i32_0, %c0_i32_1 : i32, i32, i32
  }
  func.func @transform_2(%arg0: i32) -> (i32, i32, i32) {
    %c0_i32 = arith.constant 0 : i32
    %c0_i32_0 = arith.constant 0 : i32
    %c0_i32_1 = arith.constant 0 : i32
    return %arg0, %c0_i32, %c0_i32_0 : i32, i32, i32
  }
  func.func @transform_3(%arg0: i32) -> (i32, i32, i32) {
    %c0_i32 = arith.constant 0 : i32
    %c0_i32_0 = arith.constant 0 : i32
    %c0_i32_1 = arith.constant 0 : i32
    return %arg0, %c0_i32, %c0_i32_0 : i32, i32, i32
  }
  func.func @transform_4(%arg0: i32) -> (i32, i32, i32) {
    %c0_i32 = arith.constant 0 : i32
    %c0_i32_0 = arith.constant 0 : i32
    %c0_i32_1 = arith.constant 0 : i32
    return %arg0, %c0_i32, %c0_i32_0 : i32, i32, i32
  }
}

module attributes {stable_mosaic.version = 11 : i64} {
  func.func @bn_relu_kernel(%arg0: i32, %arg1: memref<128x128xf32, #tpu.memory_space<vmem>>, %arg2: memref<1x128xf32, #tpu.memory_space<vmem>>, %arg3: memref<1x128xf32, #tpu.memory_space<vmem>>, %arg4: memref<128x128xf32, #tpu.memory_space<vmem>>) attributes {dimension_semantics = [#tpu.dimension_semantics<parallel>], iteration_bounds = array<i64: 1>, scalar_prefetch = 0 : i64, scratch_operands = 0 : i64, tpu.core_type = #tpu.core_type<tc>, window_params = [{transform_indices = @transform_0, window_bounds = array<i64: 128, 128>}, {pipeline_mode = #tpu.pipeline_mode<synchronous>, transform_indices = @transform_1, window_bounds = array<i64: 1, 128>}, {pipeline_mode = #tpu.pipeline_mode<synchronous>, transform_indices = @transform_2, window_bounds = array<i64: 1, 128>}, {transform_indices = @transform_3, window_bounds = array<i64: 128, 128>}]} {
    %c0 = arith.constant 0 : index
    %c0_0 = arith.constant 0 : index
    %0 = vector.load %arg1[%c0, %c0_0] : memref<128x128xf32, #tpu.memory_space<vmem>>, vector<128x128xf32>
    %c0_1 = arith.constant 0 : index
    %c0_2 = arith.constant 0 : index
    %1 = vector.load %arg2[%c0_1, %c0_2] : memref<1x128xf32, #tpu.memory_space<vmem>>, vector<1x128xf32>
    %2 = vector.broadcast %1 : vector<1x128xf32> to vector<128x128xf32>
    %3 = arith.mulf %0, %2 : vector<128x128xf32>
    %c0_3 = arith.constant 0 : index
    %c0_4 = arith.constant 0 : index
    %4 = vector.load %arg3[%c0_3, %c0_4] : memref<1x128xf32, #tpu.memory_space<vmem>>, vector<1x128xf32>
    %5 = vector.broadcast %4 : vector<1x128xf32> to vector<128x128xf32>
    %6 = arith.addf %3, %5 : vector<128x128xf32>
    %cst = arith.constant 0.000000e+00 : f32
    %7 = vector.broadcast %cst : f32 to vector<128x128xf32>
    %8 = arith.maximumf %6, %7 : vector<128x128xf32>
    %c0_5 = arith.constant 0 : index
    %c0_6 = arith.constant 0 : index
    %9 = vector.load %arg4[%c0_5, %c0_6] : memref<128x128xf32, #tpu.memory_space<vmem>>, vector<128x128xf32>
    tpu.vector_store %arg4[%c0_5, %c0_6], %8 {strides = array<i32>} : memref<128x128xf32, #tpu.memory_space<vmem>>, vector<128x128xf32>,
    return
  }
  func.func @transform_0(%arg0: i32) -> (i32, i32) {
    %c0_i32 = arith.constant 0 : i32
    %c0_i32_0 = arith.constant 0 : i32
    return %arg0, %c0_i32 : i32, i32
  }
  func.func @transform_1(%arg0: i32) -> (i32, i32) {
    %c0_i32 = arith.constant 0 : i32
    %c0_i32_0 = arith.constant 0 : i32
    %c0_i32_1 = arith.constant 0 : i32
    return %c0_i32, %c0_i32_0 : i32, i32
  }
  func.func @transform_2(%arg0: i32) -> (i32, i32) {
    %c0_i32 = arith.constant 0 : i32
    %c0_i32_0 = arith.constant 0 : i32
    %c0_i32_1 = arith.constant 0 : i32
    return %c0_i32, %c0_i32_0 : i32, i32
  }
  func.func @transform_3(%arg0: i32) -> (i32, i32) {
    %c0_i32 = arith.constant 0 : i32
    %c0_i32_0 = arith.constant 0 : i32
    return %arg0, %c0_i32 : i32, i32
  }
}

</mosaic_0001>

<llo_original>
// kernel: conv3d_block_forward.2
$region0: #{conv3d_block_forward.2}
  #allocation0 [shape = 'u32[]', space=smem, size = 0x4, offset = 0x4, fixed_abs, tag = 'smem constant byte address 0x4 - core index']
  #allocation1 [shape = 'u32[144,128]{1,0:T(1,128)}', space=vmem, size = 0x12000, scoped, tag = 'internal scratch']
  %s0 = inlined_call_operand.vmem [shape: f32[2,80,120], index: 0, kind: input, shape index: {}]
  %s1 = inlined_call_operand.vmem [shape: f32[3,120,128], index: 1, kind: input, shape index: {}]
  %s2 = inlined_call_operand.vmem [shape: f32[2,64,128], index: 2, kind: output, shape index: {0}]
  %s3 = inlined_call_operand.vmem [shape: f32[2,1,128], index: 3, kind: output, shape index: {1}]
  %s4 = inlined_call_operand.vmem [shape: f32[2,1,128], index: 4, kind: output, shape index: {2}]
  %5 = xla_tuple %s2, %s3, %s4
  %s6 = sld [smem:[#allocation0]]
  $region57: #{conv3d_block_forward.2} parent=0
    _
  %s8 = ssub.s32 1, %s6
  %s9 = scalar_select 0, %s8, %s6
  loop: start=0, step=1, limit=4
  $region2: #{conv3d_block_forward.2} parent=0 // loop_pre_header
    _
  $region3: #{conv3d_block_forward.2} parent=0 // loop_header
    %s11 = sphi 0, %s15
    %p12 = scmp.ge.s32.totalorder %s11, 4
    %s21 = sphi 0, %s23
    %s24 = sphi 0, %s21
    %s25 = sphi 0, %s24
    %s41 = sphi 0, %s25
    %s45 = sphi 0, %s45
    %s47 = sphi 0, %s45
    %s48 = sphi 0, %s47
    %s62 = sphi 0, %s48
    %s68 = sphi 0, %s70
    %s71 = sphi 0, %s68
    %s72 = sphi 0, %s71
    %s88 = sphi 0, %s72
    %s94 = sphi 0, %s96
    %s97 = sphi 0, %s94
    %s98 = sphi 0, %s97
    %s114 = sphi 0, %s98
    %s120 = sphi 0, %s122
    %s123 = sphi 0, %s120
    %s124 = sphi 0, %s123
    %s140 = sphi 0, %s124
  $region4: #{conv3d_block_forward.2} parent=0 // loop_header_branch
    %14 = sbr.rel (%p12) target = $region8
  $region5: #{conv3d_block_forward.2} parent=0 // loop_body
    %s16 = ssub.s32 %s11, 1
    %s17 = ssub.s32 %s11, 2
    %s18 = sadd.s32 %s11, 1
    %s19 = ssub.s32 %s11, %s18
    %p20 = scmp.eq.s32.totalorder %s19, 0
    %s22 = sadd.s32 %s21, 1
    %s23 = scalar_select %p20, %s21, %s22
    %p26 = pneg %p20
    %p27 = scmp.eq.s32.totalorder %s11, 1
    %p28 = por %p26, %p27
    %p29 = scmp.ne.s32.totalorder %s21, %s24
    %p30 = scmp.eq.s32.totalorder %s11, 0
    %p31 = por %p29, %p30
    %p32 = scmp.ne.s32.totalorder %s21, %s24
    %p33 = scmp.eq.s32.totalorder %s16, 1
    %p34 = por %p32, %p33
    %p35 = scmp.ne.s32.totalorder %s24, %s25
    %p36 = scmp.eq.s32.totalorder %s16, 0
    %p37 = por %p35, %p36
    %p38 = scmp.ne.s32.totalorder %s24, %s25
    %p39 = scmp.eq.s32.totalorder %s17, 1
    %p40 = por %p38, %p39
    %p42 = scmp.ne.s32.totalorder %s25, %s41
    %p43 = scmp.eq.s32.totalorder %s17, 0
    %p44 = por %p42, %p43
    %s46 = sadd.s32 %s45, 1
    %p49 = scmp.eq.s32.totalorder %s11, 1
    %p50 = scmp.ne.s32.totalorder %s45, %s47
    %p51 = scmp.eq.s32.totalorder %s11, 0
    %p52 = por %p50, %p51
    %p53 = scmp.ne.s32.totalorder %s45, %s47
    %p54 = scmp.eq.s32.totalorder %s16, 1
    %p55 = por %p53, %p54
    %p56 = scmp.ne.s32.totalorder %s47, %s48
    %p57 = scmp.eq.s32.totalorder %s16, 0
    %p58 = por %p56, %p57
    %p59 = scmp.ne.s32.totalorder %s47, %s48
    %p60 = scmp.eq.s32.totalorder %s17, 1
    %p61 = por %p59, %p60
    %p63 = scmp.ne.s32.totalorder %s48, %s62
    %p64 = scmp.eq.s32.totalorder %s17, 0
    %p65 = por %p63, %p64
    %s66 = ssub.s32 %s11, %s18
    %p67 = scmp.eq.s32.totalorder %s66, 0
    %s69 = sadd.s32 %s68, 1
    %s70 = scalar_select %p67, %s68, %s69
    %p73 = pneg %p67
    %p74 = scmp.eq.s32.totalorder %s11, 1
    %p75 = por %p73, %p74
    %p76 = scmp.ne.s32.totalorder %s68, %s71
    %p77 = scmp.eq.s32.totalorder %s11, 0
    %p78 = por %p76, %p77
    %p79 = scmp.ne.s32.totalorder %s68, %s71
    %p80 = scmp.eq.s32.totalorder %s16, 1
    %p81 = por %p79, %p80
    %p82 = scmp.ne.s32.totalorder %s71, %s72
    %p83 = scmp.eq.s32.totalorder %s16, 0
    %p84 = por %p82, %p83
    %p85 = scmp.ne.s32.totalorder %s71, %s72
    %p86 = scmp.eq.s32.totalorder %s17, 1
    %p87 = por %p85, %p86
    %p89 = scmp.ne.s32.totalorder %s72, %s88
    %p90 = scmp.eq.s32.totalorder %s17, 0
    %p91 = por %p89, %p90
    %s92 = ssub.s32 %s11, %s18
    %p93 = scmp.eq.s32.totalorder %s92, 0
    %s95 = sadd.s32 %s94, 1
    %s96 = scalar_select %p93, %s94, %s95
    %p99 = pneg %p93
    %p100 = scmp.eq.s32.totalorder %s11, 1
    %p101 = por %p99, %p100
    %p102 = scmp.ne.s32.totalorder %s94, %s97
    %p103 = scmp.eq.s32.totalorder %s11, 0
    %p104 = por %p102, %p103
    %p105 = scmp.ne.s32.totalorder %s94, %s97
    %p106 = scmp.eq.s32.totalorder %s16, 1
    %p107 = por %p105, %p106
    %p108 = scmp.ne.s32.totalorder %s97, %s98
    %p109 = scmp.eq.s32.totalorder %s16, 0
    %p110 = por %p108, %p109
    %p111 = scmp.ne.s32.totalorder %s97, %s98
    %p112 = scmp.eq.s32.totalorder %s17, 1
    %p113 = por %p111, %p112
    %p115 = scmp.ne.s32.totalorder %s98, %s114
    %p116 = scmp.eq.s32.totalorder %s17, 0
    %p117 = por %p115, %p116
    %s118 = ssub.s32 %s11, %s18
    %p119 = scmp.eq.s32.totalorder %s118, 0
    %s121 = sadd.s32 %s120, 1
    %s122 = scalar_select %p119, %s120, %s121
    %p125 = pneg %p119
    %p126 = scmp.eq.s32.totalorder %s11, 1
    %p127 = por %p125, %p126
    %p128 = scmp.ne.s32.totalorder %s120, %s123
    %p129 = scmp.eq.s32.totalorder %s11, 0
    %p130 = por %p128, %p129
    %p131 = scmp.ne.s32.totalorder %s120, %s123
    %p132 = scmp.eq.s32.totalorder %s16, 1
    %p133 = por %p131, %p132
    %p134 = scmp.ne.s32.totalorder %s123, %s124
    %p135 = scmp.eq.s32.totalorder %s16, 0
    %p136 = por %p134, %p135
    %p137 = scmp.ne.s32.totalorder %s123, %s124
    %p138 = scmp.eq.s32.totalorder %s17, 1
    %p139 = por %p137, %p138
    %p141 = scmp.ne.s32.totalorder %s124, %s140
    %p142 = scmp.eq.s32.totalorder %s17, 0
    %p143 = por %p141, %p142
    %p144 = scmp.le.s32.totalorder 1, %s11
    %p145 = scmp.lt.s32.totalorder %s11, 3
    %p146 = pnand %p144, %p145
    %p147 = pneg %p146
    // Predicated region
    $region9: #{conv3d_block_forward.2} parent=5 // pred_check
      _
    $region10: #{conv3d_block_forward.2} parent=5 // pred_check_branch
      %149 = sbr.rel (%p146) target = $region12
    $region11: #{conv3d_block_forward.2} parent=5 // pred_region
      %s150 = ssub.s32 %s11, 1
      // Predicated region
      $region13: #{conv3d_block_forward.2} parent=11 // pred_check
        %p151 = pneg %p58
      $region14: #{conv3d_block_forward.2} parent=11 // pred_check_branch
        %153 = sbr.rel (%p151) target = $region16
      $region15: #{conv3d_block_forward.2} parent=11 // pred_region
        _
      $region16: #{conv3d_block_forward.2} parent=11 // pred_fallthru
        _
    $region12: #{conv3d_block_forward.2} parent=5 // pred_fallthru
      _
    %p154 = scmp.lt.s32.totalorder %s11, 2
    // Predicated region
    $region17: #{conv3d_block_forward.2} parent=5 // pred_check
      %p155 = pneg %p154
    $region18: #{conv3d_block_forward.2} parent=5 // pred_check_branch
      %157 = sbr.rel (%p155) target = $region20
    $region19: #{conv3d_block_forward.2} parent=5 // pred_region
      // Predicated region
      $region21: #{conv3d_block_forward.2} parent=19 // pred_check
        %p158 = pneg %p31
      $region22: #{conv3d_block_forward.2} parent=19 // pred_check_branch
        %160 = sbr.rel (%p158) target = $region24
      $region23: #{conv3d_block_forward.2} parent=19 // pred_region
        %p161 = scmp.lt.s32.totalorder %s11, 1
        %s162 = scalar_select %p161, %s11, 1
        %s163 = smul.addr %s162, 10
        %s164 = smul.addr %s163, 8
        %s165 = scalar_lea.vmem %s0, %s164
      $region24: #{conv3d_block_forward.2} parent=19 // pred_fallthru
        _
    $region20: #{conv3d_block_forward.2} parent=5 // pred_fallthru
      _
    %p166 = scmp.le.s32.totalorder 1, %s11
    %p167 = scmp.lt.s32.totalorder %s11, 3
    %p168 = pnand %p166, %p167
    %p169 = pneg %p168
    // Predicated region
    $region25: #{conv3d_block_forward.2} parent=5 // pred_check
      _
    $region26: #{conv3d_block_forward.2} parent=5 // pred_check_branch
      %171 = sbr.rel (%p168) target = $region28
    $region27: #{conv3d_block_forward.2} parent=5 // pred_region
      %s172 = ssub.s32 %s11, 1
      %p173 = scmp.lt.s32.totalorder %s16, 1
      %s174 = scalar_select %p173, %s16, 1
      %s175 = smul.addr %s174, 10
      %s176 = smul.addr %s175, 8
      %s177 = scalar_lea.vmem %s0, %s176
      %p178 = pneg %p37
      %p179 = pneg %p34
      %p180 = pneg %p58
      %p181 = pneg %p55
      %p182 = pneg %p84
      %p183 = pneg %p81
      %p184 = scmp.lt.s32.totalorder %s16, 1
      %s185 = scalar_select %p184, %s16, 1
      %s186 = smul.addr %s185, 8
      %s187 = smul.addr %s186, 8
      %s188 = scalar_lea.vmem %s2, %s187
      %p189 = pneg %p110
      %p190 = pneg %p107
      %p191 = scmp.lt.s32.totalorder %s16, 1
      %s192 = scalar_select %p191, %s16, 1
      %s193 = scalar_lea.vmem %s3, %s192
      %p194 = pneg %p136
      %p195 = pneg %p133
      %p196 = scmp.lt.s32.totalorder %s16, 1
      %s197 = scalar_select %p196, %s16, 1
      %s198 = scalar_lea.vmem %s4, %s197
      %p199 = scmp.lt.s32.totalorder %s16, 1
      %s200 = scalar_select %p199, %s16, 1
      %s201 = smul.addr %s200, 10
      %s202 = smul.addr %s201, 8
      %s203 = scalar_lea.vmem %s0, %s202
      %p204 = scmp.lt.s32.totalorder %s16, 1
      %s205 = scalar_select %p204, %s16, 1
      %s206 = smul.addr %s205, 8
      %s207 = smul.addr %s206, 8
      %s208 = scalar_lea.vmem %s2, %s207
      %p209 = scmp.lt.s32.totalorder %s16, 1
      %s210 = scalar_select %p209, %s16, 1
      %s211 = scalar_lea.vmem %s3, %s210
      %p212 = scmp.lt.s32.totalorder %s16, 1
      %s213 = scalar_select %p212, %s16, 1
      %s214 = scalar_lea.vmem %s4, %s213
      %v215 = vld [vmem:[%s203] sm:$0xff]
      %v216 = vld [vmem:[%s203 + $0x8] sm:$0xff]
      %v217 = vld [vmem:[%s203 + $0x10] sm:$0xff]
      %v218 = vld [vmem:[%s203 + $0x18] sm:$0xff]
      %v219 = vld [vmem:[%s203 + $0x20] sm:$0xff]
      %v220 = vld [vmem:[%s203 + $0x28] sm:$0xff]
      %v221 = vld [vmem:[%s203 + $0x30] sm:$0xff]
      %v222 = vld [vmem:[%s203 + $0x38] sm:$0xff]
      %v223 = vld [vmem:[%s1] sm:$0xff]
      %v224 = vld [vmem:[%s1 + $0x8] sm:$0xff]
      %v225 = vld [vmem:[%s1 + $0x10] sm:$0xff]
      %v226 = vld [vmem:[%s1 + $0x18] sm:$0xff]
      %v227 = vld [vmem:[%s1 + $0x20] sm:$0xff]
      %v228 = vld [vmem:[%s1 + $0x28] sm:$0xff]
      %v229 = vld [vmem:[%s1 + $0x30] sm:$0xff]
      %v230 = vld [vmem:[%s1 + $0x38] sm:$0xff]
      %v231 = vld [vmem:[%s1 + $0x40] sm:$0xff]
      %v232 = vld [vmem:[%s1 + $0x48] sm:$0xff]
      %v233 = vld [vmem:[%s1 + $0x50] sm:$0xff]
      %v234 = vld [vmem:[%s1 + $0x58] sm:$0xff]
      %v235 = vld [vmem:[%s1 + $0x60] sm:$0xff]
      %v236 = vld [vmem:[%s1 + $0x68] sm:$0xff]
      %v237 = vld [vmem:[%s1 + $0x70] sm:$0xff]
      %v238 = vld [vmem:[%s203 + $0x40] sm:$0xff]
      %s239 = scalar_lea.vmem %s1, 120
      %v240 = vld [vmem:[%s239] sm:$0xff]
      %v241 = vld [vmem:[%s239 + $0x8] sm:$0xff]
      %v242 = vld [vmem:[%s239 + $0x10] sm:$0xff]
      %v243 = vld [vmem:[%s239 + $0x18] sm:$0xff]
      %v244 = vld [vmem:[%s239 + $0x20] sm:$0xff]
      %v245 = vld [vmem:[%s239 + $0x28] sm:$0xff]
      %v246 = vld [vmem:[%s239 + $0x30] sm:$0xff]
      %v247 = vld [vmem:[%s239 + $0x38] sm:$0xff]
      %v248 = vld [vmem:[%s239 + $0x40] sm:$0xff]
      %v249 = vld [vmem:[%s239 + $0x48] sm:$0xff]
      %v250 = vld [vmem:[%s239 + $0x50] sm:$0xff]
      %v251 = vld [vmem:[%s239 + $0x58] sm:$0xff]
      %v252 = vld [vmem:[%s239 + $0x60] sm:$0xff]
      %v253 = vld [vmem:[%s239 + $0x68] sm:$0xff]
      %v254 = vld [vmem:[%s239 + $0x70] sm:$0xff]
      %vm255 = vcmask 982016
      %v257 = vsel %vm255, %v216, 0
      %v260 = vsel %vm255, %v217, 0
      %v263 = vsel %vm255, %v218, 0
      %v266 = vsel %vm255, %v219, 0
      %v269 = vsel %vm255, %v220, 0
      %v272 = vsel %vm255, %v221, 0
      %v275 = vsel %vm255, %v222, 0
      %v278 = vsel %vm255, %v238, 0
      %280 = vmatprep.subr.mxu0 0.0
      %281 = vmatpush1.msra.mxu0 0.0
      %282 = vmatprep.subr.mxu0 0.0
      %283 = vmatpush1.msra.mxu0 %v254
      %284 = vmatprep.subr.mxu0 0.0
      %285 = vmatpush1.msra.mxu0 %v253
      %286 = vmatprep.subr.mxu0 0.0
      %287 = vmatpush1.msra.mxu0 %v252
      %288 = vmatprep.subr.mxu0 0.0
      %289 = vmatpush1.msra.mxu0 %v251
      %290 = vmatprep.subr.mxu0 0.0
      %291 = vmatpush1.msra.mxu0 %v250
      %292 = vmatprep.subr.mxu0 0.0
      %293 = vmatpush1.msra.mxu0 %v249
      %294 = vmatprep.subr.mxu0 0.0
      %295 = vmatpush1.msra.mxu0 %v248
      %296 = vmatprep.subr.mxu0 0.0
      %297 = vmatpush1.msra.mxu0 %v247
      %298 = vmatprep.subr.mxu0 0.0
      %299 = vmatpush1.msra.mxu0 %v246
      %300 = vmatprep.subr.mxu0 0.0
      %301 = vmatpush1.msra.mxu0 %v245
      %302 = vmatprep.subr.mxu0 0.0
      %303 = vmatpush1.msra.mxu0 %v244
      %304 = vmatprep.subr.mxu0 0.0
      %305 = vmatpush1.msra.mxu0 %v243
      %306 = vmatprep.subr.mxu0 0.0
      %307 = vmatpush1.msra.mxu0 %v242
      %308 = vmatprep.subr.mxu0 0.0
      %309 = vmatpush1.msra.mxu0 %v241
      %310 = vmatprep.subr.mxu0 0.0
      %311 = vmatpush1.msra.mxu0 %v240
      %312 = vmatprep.subr.mxu0 0.0
      %313 = vmatpush2.msra.mxu0 0.0
      %314 = vmatprep.subr.mxu0 0.0
      %315 = vmatpush2.msra.mxu0 0.0
      %316 = vmatprep.subr.mxu0 0.0
      %317 = vmatpush2.msra.mxu0 0.0
      %318 = vmatprep.subr.mxu0 0.0
      %319 = vmatpush2.msra.mxu0 0.0
      %320 = vmatprep.subr.mxu0 0.0
      %321 = vmatpush2.msra.mxu0 0.0
      %322 = vmatprep.subr.mxu0 0.0
      %323 = vmatpush2.msra.mxu0 0.0
      %324 = vmatprep.subr.mxu0 0.0
      %325 = vmatpush2.msra.mxu0 0.0
      %326 = vmatprep.subr.mxu0 0.0
      %327 = vmatpush2.msra.mxu0 0.0
      %328 = vmatprep.subr.mxu0 0.0
      %329 = vmatpush2.msra.mxu0 0.0
      %330 = vmatprep.subr.mxu0 0.0
      %331 = vmatpush2.msra.mxu0 0.0
      %332 = vmatprep.subr.mxu0 0.0
      %333 = vmatpush2.msra.mxu0 0.0
      %334 = vmatprep.subr.mxu0 0.0
      %335 = vmatpush2.msra.mxu0 0.0
      %336 = vmatprep.subr.mxu0 0.0
      %337 = vmatpush2.msra.mxu0 0.0
      %338 = vmatprep.subr.mxu0 0.0
      %339 = vmatpush2.msra.mxu0 0.0
      %340 = vmatprep.subr.mxu0 0.0
      %341 = vmatpush2.msra.mxu0 0.0
      %342 = vmatprep.subr.mxu0 0.0
      %343 = vmatpush2.msra.mxu0 0.0
      %344 = vmatprep.mubr.f32.mxu0 0.0
      %345 = vmatmul.mubr.f32.gmra.mxu0 %v257
      %v346 = vpop.f32.mrf.mxu0
      %v347 = vadd.f32 0.0, %v346
      %v348 = vpop.f32.mrf.mxu0
      %349 = vmatprep.mubr.f32.mxu0 0.0
      %350 = vmatmul.mubr.f32.gmra.mxu0 %v260
      %v351 = vpop.f32.mrf.mxu0
      %v352 = vadd.f32 0.0, %v351
      %v353 = vpop.f32.mrf.mxu0
      %354 = vmatprep.mubr.f32.mxu0 0.0
      %355 = vmatmul.mubr.f32.gmra.mxu0 %v263
      %v356 = vpop.f32.mrf.mxu0
      %v357 = vadd.f32 0.0, %v356
      %v358 = vpop.f32.mrf.mxu0
      %359 = vmatprep.mubr.f32.mxu0 0.0
      %360 = vmatmul.mubr.f32.gmra.mxu0 %v266
      %v361 = vpop.f32.mrf.mxu0
      %v362 = vadd.f32 0.0, %v361
      %v363 = vpop.f32.mrf.mxu0
      %364 = vmatprep.mubr.f32.mxu0 0.0
      %365 = vmatmul.mubr.f32.gmra.mxu0 %v269
      %v366 = vpop.f32.mrf.mxu0
      %v367 = vadd.f32 0.0, %v366
      %v368 = vpop.f32.mrf.mxu0
      %369 = vmatprep.mubr.f32.mxu0 0.0
      %370 = vmatmul.mubr.f32.gmra.mxu0 %v272
      %v371 = vpop.f32.mrf.mxu0
      %v372 = vadd.f32 0.0, %v371
      %v373 = vpop.f32.mrf.mxu0
      %374 = vmatprep.mubr.f32.mxu0 0.0
      %375 = vmatmul.mubr.f32.gmra.mxu0 %v275
      %v376 = vpop.f32.mrf.mxu0
      %v377 = vadd.f32 0.0, %v376
      %v378 = vpop.f32.mrf.mxu0
      %379 = vmatprep.mubr.f32.mxu0 0.0
      %380 = vmatmul.mubr.f32.gmra.mxu0 %v278
      %v381 = vpop.f32.mrf.mxu0
      %v382 = vadd.f32 0.0, %v381
      %v383 = vpop.f32.mrf.mxu0
      %384 = vdwg.mxu0
      %v386 = vsel %vm255, %v215, 0
      %388 = vmatprep.subr.mxu0 0.0
      %389 = vmatpush1.msra.mxu0 0.0
      %390 = vmatprep.subr.mxu0 0.0
      %391 = vmatpush1.msra.mxu0 %v237
      %392 = vmatprep.subr.mxu0 0.0
      %393 = vmatpush1.msra.mxu0 %v236
      %394 = vmatprep.subr.mxu0 0.0
      %395 = vmatpush1.msra.mxu0 %v235
      %396 = vmatprep.subr.mxu0 0.0
      %397 = vmatpush1.msra.mxu0 %v234
      %398 = vmatprep.subr.mxu0 0.0
      %399 = vmatpush1.msra.mxu0 %v233
      %400 = vmatprep.subr.mxu0 0.0
      %401 = vmatpush1.msra.mxu0 %v232
      %402 = vmatprep.subr.mxu0 0.0
      %403 = vmatpush1.msra.mxu0 %v231
      %404 = vmatprep.subr.mxu0 0.0
      %405 = vmatpush1.msra.mxu0 %v230
      %406 = vmatprep.subr.mxu0 0.0
      %407 = vmatpush1.msra.mxu0 %v229
      %408 = vmatprep.subr.mxu0 0.0
      %409 = vmatpush1.msra.mxu0 %v228
      %410 = vmatprep.subr.mxu0 0.0
      %411 = vmatpush1.msra.mxu0 %v227
      %412 = vmatprep.subr.mxu0 0.0
      %413 = vmatpush1.msra.mxu0 %v226
      %414 = vmatprep.subr.mxu0 0.0
      %415 = vmatpush1.msra.mxu0 %v225
      %416 = vmatprep.subr.mxu0 0.0
      %417 = vmatpush1.msra.mxu0 %v224
      %418 = vmatprep.subr.mxu0 0.0
      %419 = vmatpush1.msra.mxu0 %v223
      %420 = vmatprep.subr.mxu0 0.0
      %421 = vmatpush2.msra.mxu0 0.0
      %422 = vmatprep.subr.mxu0 0.0
      %423 = vmatpush2.msra.mxu0 0.0
      %424 = vmatprep.subr.mxu0 0.0
      %425 = vmatpush2.msra.mxu0 0.0
      %426 = vmatprep.subr.mxu0 0.0
      %427 = vmatpush2.msra.mxu0 0.0
      %428 = vmatprep.subr.mxu0 0.0
      %429 = vmatpush2.msra.mxu0 0.0
      %430 = vmatprep.subr.mxu0 0.0
      %431 = vmatpush2.msra.mxu0 0.0
      %432 = vmatprep.subr.mxu0 0.0
      %433 = vmatpush2.msra.mxu0 0.0
      %434 = vmatprep.subr.mxu0 0.0
      %435 = vmatpush2.msra.mxu0 0.0
      %436 = vmatprep.subr.mxu0 0.0
      %437 = vmatpush2.msra.mxu0 0.0
      %438 = vmatprep.subr.mxu0 0.0
      %439 = vmatpush2.msra.mxu0 0.0
      %440 = vmatprep.subr.mxu0 0.0
      %441 = vmatpush2.msra.mxu0 0.0
      %442 = vmatprep.subr.mxu0 0.0
      %443 = vmatpush2.msra.mxu0 0.0
      %444 = vmatprep.subr.mxu0 0.0
      %445 = vmatpush2.msra.mxu0 0.0
      %446 = vmatprep.subr.mxu0 0.0
      %447 = vmatpush2.msra.mxu0 0.0
      %448 = vmatprep.subr.mxu0 0.0
      %449 = vmatpush2.msra.mxu0 0.0
      %450 = vmatprep.subr.mxu0 0.0
      %451 = vmatpush2.msra.mxu0 0.0
      %452 = vmatprep.mubr.f32.mxu0 0.0
      %453 = vmatmul.mubr.f32.gmra.mxu0 %v386
      %v454 = vpop.f32.mrf.mxu0
      %v455 = vadd.f32 %v347, %v454
      %v456 = vpop.f32.mrf.mxu0
      %457 = vmatprep.mubr.f32.mxu0 0.0
      %458 = vmatmul.mubr.f32.gmra.mxu0 %v257
      %v459 = vpop.f32.mrf.mxu0
      %v460 = vadd.f32 %v352, %v459
      %v461 = vpop.f32.mrf.mxu0
      %462 = vmatprep.mubr.f32.mxu0 0.0
      %463 = vmatmul.mubr.f32.gmra.mxu0 %v260
      %v464 = vpop.f32.mrf.mxu0
      %v465 = vadd.f32 %v357, %v464
      %v466 = vpop.f32.mrf.mxu0
      %467 = vmatprep.mubr.f32.mxu0 0.0
      %468 = vmatmul.mubr.f32.gmra.mxu0 %v263
      %v469 = vpop.f32.mrf.mxu0
      %v470 = vadd.f32 %v362, %v469
      %v471 = vpop.f32.mrf.mxu0
      %472 = vmatprep.mubr.f32.mxu0 0.0
      %473 = vmatmul.mubr.f32.gmra.mxu0 %v266
      %v474 = vpop.f32.mrf.mxu0
      %v475 = vadd.f32 %v367, %v474
      %v476 = vpop.f32.mrf.mxu0
      %477 = vmatprep.mubr.f32.mxu0 0.0
      %478 = vmatmul.mubr.f32.gmra.mxu0 %v269
      %v479 = vpop.f32.mrf.mxu0
      %v480 = vadd.f32 %v372, %v479
      %v481 = vpop.f32.mrf.mxu0
      %482 = vmatprep.mubr.f32.mxu0 0.0
      %483 = vmatmul.mubr.f32.gmra.mxu0 %v272
      %v484 = vpop.f32.mrf.mxu0
      %v485 = vadd.f32 %v377, %v484
      %v486 = vpop.f32.mrf.mxu0
      %487 = vmatprep.mubr.f32.mxu0 0.0
      %488 = vmatmul.mubr.f32.gmra.mxu0 %v275
      %v489 = vpop.f32.mrf.mxu0
      %v490 = vadd.f32 %v382, %v489
      %v491 = vpop.f32.mrf.mxu0
      %492 = vdwg.mxu0
      %v493 = vld [vmem:[%s203 + $0x10] sm:$0xff]
      %v494 = vld [vmem:[%s203 + $0x18] sm:$0xff]
      %v495 = vld [vmem:[%s203 + $0x20] sm:$0xff]
      %v496 = vld [vmem:[%s203 + $0x28] sm:$0xff]
      %v497 = vld [vmem:[%s203 + $0x30] sm:$0xff]
      %v498 = vld [vmem:[%s203 + $0x38] sm:$0xff]
      %v499 = vld [vmem:[%s203 + $0x40] sm:$0xff]
      %v500 = vld [vmem:[%s203 + $0x48] sm:$0xff]
      %s501 = scalar_lea.vmem %s1, 240
      %v502 = vld [vmem:[%s501] sm:$0xff]
      %v503 = vld [vmem:[%s501 + $0x8] sm:$0xff]
      %v504 = vld [vmem:[%s501 + $0x10] sm:$0xff]
      %v505 = vld [vmem:[%s501 + $0x18] sm:$0xff]
      %v506 = vld [vmem:[%s501 + $0x20] sm:$0xff]
      %v507 = vld [vmem:[%s501 + $0x28] sm:$0xff]
      %v508 = vld [vmem:[%s501 + $0x30] sm:$0xff]
      %v509 = vld [vmem:[%s501 + $0x38] sm:$0xff]
      %v510 = vld [vmem:[%s501 + $0x40] sm:$0xff]
      %v511 = vld [vmem:[%s501 + $0x48] sm:$0xff]
      %v512 = vld [vmem:[%s501 + $0x50] sm:$0xff]
      %v513 = vld [vmem:[%s501 + $0x58] sm:$0xff]
      %v514 = vld [vmem:[%s501 + $0x60] sm:$0xff]
      %v515 = vld [vmem:[%s501 + $0x68] sm:$0xff]
      %v516 = vld [vmem:[%s501 + $0x70] sm:$0xff]
      %v518 = vsel %vm255, %v493, 0
      %v521 = vsel %vm255, %v494, 0
      %v524 = vsel %vm255, %v495, 0
      %v527 = vsel %vm255, %v496, 0
      %v530 = vsel %vm255, %v497, 0
      %v533 = vsel %vm255, %v498, 0
      %v536 = vsel %vm255, %v499, 0
      %v539 = vsel %vm255, %v500, 0
      %541 = vmatprep.subr.mxu0 0.0
      %542 = vmatpush1.msra.mxu0 0.0
      %543 = vmatprep.subr.mxu0 0.0
      %544 = vmatpush1.msra.mxu0 %v516
      %545 = vmatprep.subr.mxu0 0.0
      %546 = vmatpush1.msra.mxu0 %v515
      %547 = vmatprep.subr.mxu0 0.0
      %548 = vmatpush1.msra.mxu0 %v514
      %549 = vmatprep.subr.mxu0 0.0
      %550 = vmatpush1.msra.mxu0 %v513
      %551 = vmatprep.subr.mxu0 0.0
      %552 = vmatpush1.msra.mxu0 %v512
      %553 = vmatprep.subr.mxu0 0.0
      %554 = vmatpush1.msra.mxu0 %v511
      %555 = vmatprep.subr.mxu0 0.0
      %556 = vmatpush1.msra.mxu0 %v510
      %557 = vmatprep.subr.mxu0 0.0
      %558 = vmatpush1.msra.mxu0 %v509
      %559 = vmatprep.subr.mxu0 0.0
      %560 = vmatpush1.msra.mxu0 %v508
      %561 = vmatprep.subr.mxu0 0.0
      %562 = vmatpush1.msra.mxu0 %v507
      %563 = vmatprep.subr.mxu0 0.0
      %564 = vmatpush1.msra.mxu0 %v506
      %565 = vmatprep.subr.mxu0 0.0
      %566 = vmatpush1.msra.mxu0 %v505
      %567 = vmatprep.subr.mxu0 0.0
      %568 = vmatpush1.msra.mxu0 %v504
      %569 = vmatprep.subr.mxu0 0.0
      %570 = vmatpush1.msra.mxu0 %v503
      %571 = vmatprep.subr.mxu0 0.0
      %572 = vmatpush1.msra.mxu0 %v502
      %573 = vmatprep.subr.mxu0 0.0
      %574 = vmatpush2.msra.mxu0 0.0
      %575 = vmatprep.subr.mxu0 0.0
      %576 = vmatpush2.msra.mxu0 0.0
      %577 = vmatprep.subr.mxu0 0.0
      %578 = vmatpush2.msra.mxu0 0.0
      %579 = vmatprep.subr.mxu0 0.0
      %580 = vmatpush2.msra.mxu0 0.0
      %581 = vmatprep.subr.mxu0 0.0
      %582 = vmatpush2.msra.mxu0 0.0
      %583 = vmatprep.subr.mxu0 0.0
      %584 = vmatpush2.msra.mxu0 0.0
      %585 = vmatprep.subr.mxu0 0.0
      %586 = vmatpush2.msra.mxu0 0.0
      %587 = vmatprep.subr.mxu0 0.0
      %588 = vmatpush2.msra.mxu0 0.0
      %589 = vmatprep.subr.mxu0 0.0
      %590 = vmatpush2.msra.mxu0 0.0
      %591 = vmatprep.subr.mxu0 0.0
      %592 = vmatpush2.msra.mxu0 0.0
      %593 = vmatprep.subr.mxu0 0.0
      %594 = vmatpush2.msra.mxu0 0.0
      %595 = vmatprep.subr.mxu0 0.0
      %596 = vmatpush2.msra.mxu0 0.0
      %597 = vmatprep.subr.mxu0 0.0
      %598 = vmatpush2.msra.mxu0 0.0
      %599 = vmatprep.subr.mxu0 0.0
      %600 = vmatpush2.msra.mxu0 0.0
      %601 = vmatprep.subr.mxu0 0.0
      %602 = vmatpush2.msra.mxu0 0.0
      %603 = vmatprep.subr.mxu0 0.0
      %604 = vmatpush2.msra.mxu0 0.0
      %605 = vmatprep.mubr.f32.mxu0 0.0
      %606 = vmatmul.mubr.f32.gmra.mxu0 %v518
      %v607 = vpop.f32.mrf.mxu0
      %v608 = vadd.f32 0.0, %v607
      %v609 = vpop.f32.mrf.mxu0
      %610 = vmatprep.mubr.f32.mxu0 0.0
      %611 = vmatmul.mubr.f32.gmra.mxu0 %v521
      %v612 = vpop.f32.mrf.mxu0
      %v613 = vadd.f32 0.0, %v612
      %v614 = vpop.f32.mrf.mxu0
      %615 = vmatprep.mubr.f32.mxu0 0.0
      %616 = vmatmul.mubr.f32.gmra.mxu0 %v524
      %v617 = vpop.f32.mrf.mxu0
      %v618 = vadd.f32 0.0, %v617
      %v619 = vpop.f32.mrf.mxu0
      %620 = vmatprep.mubr.f32.mxu0 0.0
      %621 = vmatmul.mubr.f32.gmra.mxu0 %v527
      %v622 = vpop.f32.mrf.mxu0
      %v623 = vadd.f32 0.0, %v622
      %v624 = vpop.f32.mrf.mxu0
      %625 = vmatprep.mubr.f32.mxu0 0.0
      %626 = vmatmul.mubr.f32.gmra.mxu0 %v530
      %v627 = vpop.f32.mrf.mxu0
      %v628 = vadd.f32 0.0, %v627
      %v629 = vpop.f32.mrf.mxu0
      %630 = vmatprep.mubr.f32.mxu0 0.0
      %631 = vmatmul.mubr.f32.gmra.mxu0 %v533
      %v632 = vpop.f32.mrf.mxu0
      %v633 = vadd.f32 0.0, %v632
      %v634 = vpop.f32.mrf.mxu0
      %635 = vmatprep.mubr.f32.mxu0 0.0
      %636 = vmatmul.mubr.f32.gmra.mxu0 %v536
      %v637 = vpop.f32.mrf.mxu0
      %v638 = vadd.f32 0.0, %v637
      %v639 = vpop.f32.mrf.mxu0
      %640 = vmatprep.mubr.f32.mxu0 0.0
      %641 = vmatmul.mubr.f32.gmra.mxu0 %v539
      %v642 = vpop.f32.mrf.mxu0
      %v643 = vadd.f32 0.0, %v642
      %v644 = vpop.f32.mrf.mxu0
      %645 = vdwg.mxu0
      %v646 = vadd.f32 %v455, %v608
      %v647 = vadd.f32 %v460, %v613
      %v648 = vadd.f32 %v465, %v618
      %v649 = vadd.f32 %v470, %v623
      %v650 = vadd.f32 %v475, %v628
      %v651 = vadd.f32 %v480, %v633
      %v652 = vadd.f32 %v485, %v638
      %v653 = vadd.f32 %v490, %v643
      %654 = vst [vmem:[%s208] sm:$0xff] %v646
      %655 = vst [vmem:[%s208 + $0x8] sm:$0xff] %v647
      %656 = vst [vmem:[%s208 + $0x10] sm:$0xff] %v648
      %657 = vst [vmem:[%s208 + $0x18] sm:$0xff] %v649
      %658 = vst [vmem:[%s208 + $0x20] sm:$0xff] %v650
      %659 = vst [vmem:[%s208 + $0x28] sm:$0xff] %v651
      %660 = vst [vmem:[%s208 + $0x30] sm:$0xff] %v652
      %661 = vst [vmem:[%s208 + $0x38] sm:$0xff] %v653
      %v662 = vadd.f32 %v646, %v647
      %v663 = vadd.f32 %v662, %v648
      %v664 = vadd.f32 %v663, %v649
      %v665 = vadd.f32 %v664, %v650
      %v666 = vadd.f32 %v665, %v651
      %v667 = vadd.f32 %v666, %v652
      %v668 = vadd.f32 %v667, %v653
      %v669 = vrot.slane %v668, 4
      %v670 = vadd.f32 %v668, %v669
      %v671 = vrot.slane %v670, 2
      %v672 = vadd.f32 %v670, %v671
      %v673 = vrot.slane %v672, 1
      %v674 = vadd.f32 %v672, %v673
      %675 = vst [vmem:[%s211] sm:$0x1] %v674
      %v676 = vmul.f32 %v646, %v646
      %v677 = vmul.f32 %v647, %v647
      %v678 = vmul.f32 %v648, %v648
      %v679 = vmul.f32 %v649, %v649
      %v680 = vmul.f32 %v650, %v650
      %v681 = vmul.f32 %v651, %v651
      %v682 = vmul.f32 %v652, %v652
      %v683 = vmul.f32 %v653, %v653
      %v684 = vadd.f32 %v676, %v677
      %v685 = vadd.f32 %v684, %v678
      %v686 = vadd.f32 %v685, %v679
      %v687 = vadd.f32 %v686, %v680
      %v688 = vadd.f32 %v687, %v681
      %v689 = vadd.f32 %v688, %v682
      %v690 = vadd.f32 %v689, %v683
      %v691 = vrot.slane %v690, 4
      %v692 = vadd.f32 %v690, %v691
      %v693 = vrot.slane %v692, 2
      %v694 = vadd.f32 %v692, %v693
      %v695 = vrot.slane %v694, 1
      %v696 = vadd.f32 %v694, %v695
      %697 = vst [vmem:[%s214] sm:$0x1] %v696
      %p698 = scmp.lt.s32.totalorder %s16, 1
      %s699 = scalar_select %p698, %s16, 1
      %s700 = smul.addr %s699, 8
      %s701 = smul.addr %s700, 8
      %s702 = scalar_lea.vmem %s2, %s701
      %p703 = scmp.lt.s32.totalorder %s16, 1
      %s704 = scalar_select %p703, %s16, 1
      %s705 = scalar_lea.vmem %s3, %s704
      %p706 = scmp.lt.s32.totalorder %s16, 1
      %s707 = scalar_select %p706, %s16, 1
      %s708 = scalar_lea.vmem %s4, %s707
      // Predicated region
      $region29: #{conv3d_block_forward.2} parent=27 // pred_check
        %p709 = pneg %p81
      $region30: #{conv3d_block_forward.2} parent=27 // pred_check_branch
        %711 = sbr.rel (%p709) target = $region32
      $region31: #{conv3d_block_forward.2} parent=27 // pred_region
        _
      $region32: #{conv3d_block_forward.2} parent=27 // pred_fallthru
        _
      // Predicated region
      $region33: #{conv3d_block_forward.2} parent=27 // pred_check
        %p712 = pneg %p107
      $region34: #{conv3d_block_forward.2} parent=27 // pred_check_branch
        %714 = sbr.rel (%p712) target = $region36
      $region35: #{conv3d_block_forward.2} parent=27 // pred_region
        _
      $region36: #{conv3d_block_forward.2} parent=27 // pred_fallthru
        _
      // Predicated region
      $region37: #{conv3d_block_forward.2} parent=27 // pred_check
        %p715 = pneg %p133
      $region38: #{conv3d_block_forward.2} parent=27 // pred_check_branch
        %717 = sbr.rel (%p715) target = $region40
      $region39: #{conv3d_block_forward.2} parent=27 // pred_region
        _
      $region40: #{conv3d_block_forward.2} parent=27 // pred_fallthru
        _
    $region28: #{conv3d_block_forward.2} parent=5 // pred_fallthru
      _
    %p718 = scmp.le.s32.totalorder 2, %s11
    // Predicated region
    $region41: #{conv3d_block_forward.2} parent=5 // pred_check
      %p719 = pneg %p718
    $region42: #{conv3d_block_forward.2} parent=5 // pred_check_branch
      %721 = sbr.rel (%p719) target = $region44
    $region43: #{conv3d_block_forward.2} parent=5 // pred_region
      %s722 = ssub.s32 %s11, 2
      // Predicated region
      $region45: #{conv3d_block_forward.2} parent=43 // pred_check
        %p723 = pneg %p87
      $region46: #{conv3d_block_forward.2} parent=43 // pred_check_branch
        %725 = sbr.rel (%p723) target = $region48
      $region47: #{conv3d_block_forward.2} parent=43 // pred_region
        %p726 = scmp.lt.s32.totalorder %s17, 1
        %s727 = scalar_select %p726, %s17, 1
        %s728 = smul.addr %s727, 8
        %s729 = smul.addr %s728, 8
        %s730 = scalar_lea.vmem %s2, %s729
      $region48: #{conv3d_block_forward.2} parent=43 // pred_fallthru
        _
      // Predicated region
      $region49: #{conv3d_block_forward.2} parent=43 // pred_check
        %p731 = pneg %p113
      $region50: #{conv3d_block_forward.2} parent=43 // pred_check_branch
        %733 = sbr.rel (%p731) target = $region52
      $region51: #{conv3d_block_forward.2} parent=43 // pred_region
        %p734 = scmp.lt.s32.totalorder %s17, 1
        %s735 = scalar_select %p734, %s17, 1
        %s736 = scalar_lea.vmem %s3, %s735
      $region52: #{conv3d_block_forward.2} parent=43 // pred_fallthru
        _
      // Predicated region
      $region53: #{conv3d_block_forward.2} parent=43 // pred_check
        %p737 = pneg %p139
      $region54: #{conv3d_block_forward.2} parent=43 // pred_check_branch
        %739 = sbr.rel (%p737) target = $region56
      $region55: #{conv3d_block_forward.2} parent=43 // pred_region
        %p740 = scmp.lt.s32.totalorder %s17, 1
        %s741 = scalar_select %p740, %s17, 1
        %s742 = scalar_lea.vmem %s4, %s741
      $region56: #{conv3d_block_forward.2} parent=43 // pred_fallthru
        _
    $region44: #{conv3d_block_forward.2} parent=5 // pred_fallthru
      _
  $region6: #{conv3d_block_forward.2} parent=0 // loop_footer
    %s15 = sadd.s32 1, %s11
  $region7: #{conv3d_block_forward.2} parent=0 // loop_footer_branch
    %10 = sbr.rel target = $region3
  $region8: #{conv3d_block_forward.2} parent=0 // loop_exit
    _

// kernel: tile.14
$region0: #{tile.14}
  %s0 = inlined_call_operand.vmem [shape: f32[8,16], index: 0, kind: input, shape index: {}]
  %s1 = inlined_call_operand.vmem [shape: f32[1,128], index: 1, kind: output, shape index: {}]
  $region1: #{tile.14} parent=0
    #allocation0 [shape = 'u8[4096]{0}', space=vmem, size = 0x1000, scoped, tag = 'scoped mem for output reshape']
    %v2 = vld [vmem:[%s0] sm:$0x1]
    %vm3 = vcmask 130048
    %4 = vst.msk [vmem:[#allocation0] sm:$0x1] %vm3, %v2
    %s5 = scalar_lea.vmem %s0, 7
    %v6 = vld [vmem:[%s5] sm:$0x1]
    %7 = vrot.lane.b32.xlu0 %v6, 112
    %v8 = vpop.permute.xlu0 %7
    %vm9 = vcmask 1048448
    %10 = vst.msk [vmem:[#allocation0] sm:$0x1] %vm9, %v8
    %s11 = scalar_lea.vmem %s0, 6
    %v12 = vld [vmem:[%s11] sm:$0x1]
    %13 = vrot.lane.b32.xlu0 %v12, 96
    %v14 = vpop.permute.xlu0 %13
    %vm15 = vcmask 917248
    %16 = vst.msk [vmem:[#allocation0] sm:$0x1] %vm15, %v14
    %s17 = scalar_lea.vmem %s0, 5
    %v18 = vld [vmem:[%s17] sm:$0x1]
    %19 = vrot.lane.b32.xlu0 %v18, 80
    %v20 = vpop.permute.xlu0 %19
    %vm21 = vcmask 786048
    %22 = vst.msk [vmem:[#allocation0] sm:$0x1] %vm21, %v20
    %s23 = scalar_lea.vmem %s0, 4
    %v24 = vld [vmem:[%s23] sm:$0x1]
    %25 = vrot.lane.b32.xlu0 %v24, 64
    %v26 = vpop.permute.xlu0 %25
    %vm27 = vcmask 654848
    %28 = vst.msk [vmem:[#allocation0] sm:$0x1] %vm27, %v26
    %s29 = scalar_lea.vmem %s0, 3
    %v30 = vld [vmem:[%s29] sm:$0x1]
    %31 = vrot.lane.b32.xlu0 %v30, 48
    %v32 = vpop.permute.xlu0 %31
    %vm33 = vcmask 523648
    %34 = vst.msk [vmem:[#allocation0] sm:$0x1] %vm33, %v32
    %s35 = scalar_lea.vmem %s0, 2
    %v36 = vld [vmem:[%s35] sm:$0x1]
    %37 = vrot.lane.b32.xlu0 %v36, 32
    %v38 = vpop.permute.xlu0 %37
    %vm39 = vcmask 392448
    %40 = vst.msk [vmem:[#allocation0] sm:$0x1] %vm39, %v38
    %s41 = scalar_lea.vmem %s0, 1
    %v42 = vld [vmem:[%s41] sm:$0x1]
    %43 = vrot.lane.b32.xlu0 %v42, 16
    %v44 = vpop.permute.xlu0 %43
    %vm45 = vcmask 261248
    %46 = vst.msk [vmem:[#allocation0] sm:$0x1] %vm45, %v44
    %s48 = sshll.u32 1, 1
    %s49 = ssub.s32 %s48, 1
    %v51 = vld [vmem:[#allocation0] sm:%s49]
    %s52 = sshll.u32 1, 1
    %s53 = ssub.s32 %s52, 1
    %54 = vst [vmem:[%s1] sm:%s53] %v51

// kernel: tile.13
$region0: #{tile.13}
  #allocation0 [shape = 's32[1]{0}', space=sflag, size = 0x4, scoped, tag = 'scoped memory for tile.13']
  %s0 = inlined_call_operand.vmem [shape: f32[16], index: 0, kind: input, shape index: {}]
  %s1 = inlined_call_operand.vmem [shape: f32[8,16], index: 1, kind: output, shape index: {}]
  // Predicated region
  $region2: #{tile.13} parent=0 // pred_check
    _
  $region3: #{tile.13} parent=0 // pred_check_branch
    %3 = sbr.rel (0) target = $region5
  $region4: #{tile.13} parent=0 // pred_region
    _
  $region5: #{tile.13} parent=0 // pred_fallthru
    _
  %v4 = vld [vmem:[%s0] ss:$0 sm:$0xff]
  %5 = vst [vmem:[%s1] sm:$0xff] %v4

// kernel: conv3d_block_forward.3
$region0: #{conv3d_block_forward.3}
  #allocation0 [shape = 'u32[]', space=smem, size = 0x4, offset = 0x4, fixed_abs, tag = 'smem constant byte address 0x4 - core index']
  #allocation1 [shape = 'u32[144,128]{1,0:T(1,128)}', space=vmem, size = 0x12000, scoped, tag = 'internal scratch']
  %s0 = inlined_call_operand.vmem [shape: f32[128,128], index: 0, kind: input, shape index: {}]
  %s1 = inlined_call_operand.vmem [shape: f32[1,128], index: 1, kind: input, shape index: {}]
  %s2 = inlined_call_operand.vmem [shape: f32[1,128], index: 2, kind: input, shape index: {}]
  %s3 = inlined_call_operand.vmem [shape: f32[128,128], index: 3, kind: output, shape index: {}]
  %s4 = sld [smem:[#allocation0]]
  $region22: #{conv3d_block_forward.3} parent=0
    _
  %s6 = ssub.s32 1, %s4
  %s7 = scalar_select 0, %s6, %s4
  // Predicated region
  $region2: #{conv3d_block_forward.3} parent=0 // pred_check
    _
  $region3: #{conv3d_block_forward.3} parent=0 // pred_check_branch
    %9 = sbr.rel (0) target = $region5
  $region4: #{conv3d_block_forward.3} parent=0 // pred_region
    _
  $region5: #{conv3d_block_forward.3} parent=0 // pred_fallthru
    _
  // Predicated region
  $region6: #{conv3d_block_forward.3} parent=0 // pred_check
    _
  $region7: #{conv3d_block_forward.3} parent=0 // pred_check_branch
    %11 = sbr.rel (0) target = $region9
  $region8: #{conv3d_block_forward.3} parent=0 // pred_region
    _
  $region9: #{conv3d_block_forward.3} parent=0 // pred_fallthru
    _
  // Predicated region
  $region10: #{conv3d_block_forward.3} parent=0 // pred_check
    _
  $region11: #{conv3d_block_forward.3} parent=0 // pred_check_branch
    %13 = sbr.rel (0) target = $region13
  $region12: #{conv3d_block_forward.3} parent=0 // pred_region
    _
  $region13: #{conv3d_block_forward.3} parent=0 // pred_fallthru
    _
  %v14 = vld [vmem:[%s0] sm:$0xff]
  %v15 = vld [vmem:[%s0 + $0x8] sm:$0xff]
  %v16 = vld [vmem:[%s0 + $0x10] sm:$0xff]
  %v17 = vld [vmem:[%s0 + $0x18] sm:$0xff]
  %v18 = vld [vmem:[%s0 + $0x20] sm:$0xff]
  %v19 = vld [vmem:[%s0 + $0x28] sm:$0xff]
  %v20 = vld [vmem:[%s0 + $0x30] sm:$0xff]
  %v21 = vld [vmem:[%s0 + $0x38] sm:$0xff]
  %v22 = vld [vmem:[%s0 + $0x40] sm:$0xff]
  %v23 = vld [vmem:[%s0 + $0x48] sm:$0xff]
  %v24 = vld [vmem:[%s0 + $0x50] sm:$0xff]
  %v25 = vld [vmem:[%s0 + $0x58] sm:$0xff]
  %v26 = vld [vmem:[%s0 + $0x60] sm:$0xff]
  %v27 = vld [vmem:[%s0 + $0x68] sm:$0xff]
  %v28 = vld [vmem:[%s0 + $0x70] sm:$0xff]
  %v29 = vld [vmem:[%s0 + $0x78] sm:$0xff]
  %v30 = vld [vmem:[%s1] sm:$0x1]
  %v32 = vlaneseq
  %v33 = vshrl.u32 %v32, 7
  %v34 = vsub.s32 0, %v33
  %v35 = vrot.slane %v30, %v34
  %v37 = vmul.f32 %v14, %v35
  %v38 = vmul.f32 %v15, %v35
  %v39 = vmul.f32 %v16, %v35
  %v40 = vmul.f32 %v17, %v35
  %v41 = vmul.f32 %v18, %v35
  %v42 = vmul.f32 %v19, %v35
  %v43 = vmul.f32 %v20, %v35
  %v44 = vmul.f32 %v21, %v35
  %v45 = vmul.f32 %v22, %v35
  %v46 = vmul.f32 %v23, %v35
  %v47 = vmul.f32 %v24, %v35
  %v48 = vmul.f32 %v25, %v35
  %v49 = vmul.f32 %v26, %v35
  %v50 = vmul.f32 %v27, %v35
  %v51 = vmul.f32 %v28, %v35
  %v52 = vmul.f32 %v29, %v35
  %v53 = vld [vmem:[%s2] sm:$0x1]
  %v55 = vlaneseq
  %v56 = vshrl.u32 %v55, 7
  %v57 = vsub.s32 0, %v56
  %v58 = vrot.slane %v53, %v57
  %v60 = vadd.f32 %v37, %v58
  %v61 = vadd.f32 %v38, %v58
  %v62 = vadd.f32 %v39, %v58
  %v63 = vadd.f32 %v40, %v58
  %v64 = vadd.f32 %v41, %v58
  %v65 = vadd.f32 %v42, %v58
  %v66 = vadd.f32 %v43, %v58
  %v67 = vadd.f32 %v44, %v58
  %v68 = vadd.f32 %v45, %v58
  %v69 = vadd.f32 %v46, %v58
  %v70 = vadd.f32 %v47, %v58
  %v71 = vadd.f32 %v48, %v58
  %v72 = vadd.f32 %v49, %v58
  %v73 = vadd.f32 %v50, %v58
  %v74 = vadd.f32 %v51, %v58
  %v75 = vadd.f32 %v52, %v58
  %v76 = vmax.f32 %v60, 0.0
  %v77 = vmax.f32 %v61, 0.0
  %v78 = vmax.f32 %v62, 0.0
  %v79 = vmax.f32 %v63, 0.0
  %v80 = vmax.f32 %v64, 0.0
  %v81 = vmax.f32 %v65, 0.0
  %v82 = vmax.f32 %v66, 0.0
  %v83 = vmax.f32 %v67, 0.0
  %v84 = vmax.f32 %v68, 0.0
  %v85 = vmax.f32 %v69, 0.0
  %v86 = vmax.f32 %v70, 0.0
  %v87 = vmax.f32 %v71, 0.0
  %v88 = vmax.f32 %v72, 0.0
  %v89 = vmax.f32 %v73, 0.0
  %v90 = vmax.f32 %v74, 0.0
  %v91 = vmax.f32 %v75, 0.0
  %92 = vst [vmem:[%s3] sm:$0xff] %v76
  %93 = vst [vmem:[%s3 + $0x8] sm:$0xff] %v77
  %94 = vst [vmem:[%s3 + $0x10] sm:$0xff] %v78
  %95 = vst [vmem:[%s3 + $0x18] sm:$0xff] %v79
  %96 = vst [vmem:[%s3 + $0x20] sm:$0xff] %v80
  %97 = vst [vmem:[%s3 + $0x28] sm:$0xff] %v81
  %98 = vst [vmem:[%s3 + $0x30] sm:$0xff] %v82
  %99 = vst [vmem:[%s3 + $0x38] sm:$0xff] %v83
  %100 = vst [vmem:[%s3 + $0x40] sm:$0xff] %v84
  %101 = vst [vmem:[%s3 + $0x48] sm:$0xff] %v85
  %102 = vst [vmem:[%s3 + $0x50] sm:$0xff] %v86
  %103 = vst [vmem:[%s3 + $0x58] sm:$0xff] %v87
  %104 = vst [vmem:[%s3 + $0x60] sm:$0xff] %v88
  %105 = vst [vmem:[%s3 + $0x68] sm:$0xff] %v89
  %106 = vst [vmem:[%s3 + $0x70] sm:$0xff] %v90
  %107 = vst [vmem:[%s3 + $0x78] sm:$0xff] %v91
  // Predicated region
  $region14: #{conv3d_block_forward.3} parent=0 // pred_check
    _
  $region15: #{conv3d_block_forward.3} parent=0 // pred_check_branch
    %109 = sbr.rel (0) target = $region17
  $region16: #{conv3d_block_forward.3} parent=0 // pred_region
    _
  $region17: #{conv3d_block_forward.3} parent=0 // pred_fallthru
    _
  // Predicated region
  $region18: #{conv3d_block_forward.3} parent=0 // pred_check
    _
  $region19: #{conv3d_block_forward.3} parent=0 // pred_check_branch
    %111 = sbr.rel (0) target = $region21
  $region20: #{conv3d_block_forward.3} parent=0 // pred_region
    _
  $region21: #{conv3d_block_forward.3} parent=0 // pred_fallthru
    _

</llo_original>
